<compile_context>
chip_gen: v6e
topology: v6e:2x2x1
jax: 0.10.0
libtpu: 0.0.40
codegen_flags: <defaults>
</compile_context>

<pallas_src>
import jax
import jax.numpy as jnp
from jax.experimental import pallas as pl
from jax.experimental.pallas import tpu as pltpu

NEG_SLOPE = 0.01  # nn.LeakyReLU default
LANE = 128
SUBLANE = 8


def _round_up(x, m):
    return ((x + m - 1) // m) * m


def _leaky_relu(x):
    return jnp.where(x > 0, x, NEG_SLOPE * x)


# ----------------------------------------------------------------------------
# Kernel: block-diagonal first layer as two dots (no concat, no padded-K DMA),
# one LeakyReLU pass, merge GEMM straight to an unpadded key_dim output.
# ----------------------------------------------------------------------------
def _fused_mlp_kernel(pre_ref, rnn_ref, wl_ref, we_ref, b1_ref, w2_ref, b2_ref,
                      out_ref):
    # h = [pre @ W_l | rnn @ W_e]  (hidden layout already matches torch.cat order)
    h = jnp.dot(pre_ref[...], wl_ref[...], preferred_element_type=jnp.float32)
    h = h + jnp.dot(rnn_ref[...], we_ref[...], preferred_element_type=jnp.float32)
    h = _leaky_relu(h + b1_ref[...])                      # bias + act in f32
    out = jnp.dot(h.astype(w2_ref.dtype), w2_ref[...],
                  preferred_element_type=jnp.float32)
    out_ref[...] = (out + b2_ref[...]).astype(out_ref.dtype)


# ----------------------------------------------------------------------------
# One-time parameter preparation: fold the three Linears into the fused layout.
# Hidden ordering is [linear branch | enhance branch | zero pad] so the merge
# weight rows line up exactly with the reference torch.cat((h, enhance), 2).
# ----------------------------------------------------------------------------
def prepare_fused_params(params, *, dtype=jnp.float32):
    w_enh, b_enh, w_lin, b_lin, w_mrg, b_mrg = params
    input_dim, enhance_dim = w_enh.shape
    decoder_dim, linear_dim = w_lin.shape
    key_dim = w_mrg.shape[1]
    d_h = linear_dim + enhance_dim
    d_h_p = _round_up(d_h, LANE)  # lane-dense hidden tile

    # First layer as the two row-blocks of a block-diagonal weight.
    wl = jnp.zeros((decoder_dim, d_h_p), jnp.float32)
    wl = wl.at[:, :linear_dim].set(w_lin.astype(jnp.float32))
    we = jnp.zeros((input_dim, d_h_p), jnp.float32)
    we = we.at[:, linear_dim:d_h].set(w_enh.astype(jnp.float32))
    b1 = jnp.zeros((1, d_h_p), jnp.float32)
    b1 = b1.at[:, :linear_dim].set(b_lin.astype(jnp.float32))
    b1 = b1.at[:, linear_dim:d_h].set(b_enh.astype(jnp.float32))

    # Merge layer: padded hidden rows are zero; output lanes stay unpadded.
    w2 = jnp.zeros((d_h_p, key_dim), jnp.float32)
    w2 = w2.at[:d_h, :].set(w_mrg.astype(jnp.float32))
    b2 = jnp.asarray(b_mrg, jnp.float32).reshape(1, key_dim)

    # Weights follow the requested compute dtype; biases stay f32.
    return (wl.astype(dtype), we.astype(dtype), b1, w2.astype(dtype), b2)


# ----------------------------------------------------------------------------
# Plain-XLA fallback for tiny batches (single grid step would be pure overhead).
# ----------------------------------------------------------------------------
def _xla_forward(pre2d, rnn2d, wl, we, b1, w2, b2):
    h = jnp.dot(pre2d, wl, preferred_element_type=jnp.float32)
    h = h + jnp.dot(rnn2d, we, preferred_element_type=jnp.float32)
    h = _leaky_relu(h + b1)
    out = jnp.dot(h.astype(w2.dtype), w2, preferred_element_type=jnp.float32)
    return out + b2


# ----------------------------------------------------------------------------
# Wrapper
# ----------------------------------------------------------------------------
def query_with_enhance_input(pre_context_out, rnn_input, fused_params, *,
                             batch_tile=512, use_pallas=None):
    """pre_context_out: (B, 1, decoder_dim), rnn_input: (B, 1, input_dim).

    Returns (B, key_dim, 1) matching the PyTorch module's output.
    """
    B, T, decoder_dim = pre_context_out.shape
    assert T == 1, "final .view(B, key_dim, 1) requires seq length 1"
    input_dim = rnn_input.shape[-1]

    wl, we, b1, w2, b2 = fused_params
    key_dim = w2.shape[1]
    act_dtype = wl.dtype

    pre2d = pre_context_out.reshape(B, decoder_dim).astype(act_dtype)
    rnn2d = rnn_input.reshape(B, input_dim).astype(act_dtype)

    if use_pallas is None:
        use_pallas = B > 64  # single-step grid => kernel launch is pure overhead
    if not use_pallas:
        out2d = _xla_forward(pre2d, rnn2d, wl, we, b1, w2, b2)
        return out2d.reshape(B, key_dim, 1)

    # Sublane-aligned batch tile; aim for >= 2 grid steps (v7x megacore) while
    # capping at batch_tile so VMEM stays tiny and DMAs stay long.
    sub = SUBLANE if act_dtype == jnp.float32 else 2 * SUBLANE  # bf16 packs 16 rows/vreg
    tb = min(batch_tile, max(sub, _round_up(pl.cdiv(B, 2), sub)))
    b_pad = _round_up(B, tb)
    if b_pad != B:
        pre2d = jnp.pad(pre2d, ((0, b_pad - B), (0, 0)))
        rnn2d = jnp.pad(rnn2d, ((0, b_pad - B), (0, 0)))

    grid = (b_pad // tb,)
    out2d = pl.pallas_call(
        _fused_mlp_kernel,
        out_shape=jax.ShapeDtypeStruct((b_pad, key_dim), jnp.float32),
        grid=grid,
        in_specs=[
            pl.BlockSpec((tb, decoder_dim), lambda i: (i, 0)),  # activations tiled on batch
            pl.BlockSpec((tb, input_dim), lambda i: (i, 0)),
            pl.BlockSpec(wl.shape, lambda i: (0, 0)),           # weights VMEM-resident
            pl.BlockSpec(we.shape, lambda i: (0, 0)),
            pl.BlockSpec(b1.shape, lambda i: (0, 0)),
            pl.BlockSpec(w2.shape, lambda i: (0, 0)),
            pl.BlockSpec(b2.shape, lambda i: (0, 0)),
        ],
        out_specs=pl.BlockSpec((tb, key_dim), lambda i: (i, 0)),
        compiler_params=pltpu.CompilerParams(
            dimension_semantics=("parallel",)),                  # megacore on v7x
    )(pre2d, rnn2d, wl, we, b1, w2, b2)

    # Drop batch padding, then match the module's .view(B, key_dim, 1).
    return out2d[:B].reshape(B, key_dim, 1)


# ----------------------------------------------------------------------------
# Params / reference (unfused, for the correctness check)
# ----------------------------------------------------------------------------
def init_params(key, input_dim, enhance_dim, decoder_dim, linear_dim, key_dim):
    ks = jax.random.split(key, 6)
    scale = 0.1
    w_enh = scale * jax.random.normal(ks[0], (input_dim, enhance_dim), jnp.float32)
    b_enh = scale * jax.random.normal(ks[1], (1, enhance_dim), jnp.float32)
    w_lin = scale * jax.random.normal(ks[2], (decoder_dim, linear_dim), jnp.float32)
    b_lin = scale * jax.random.normal(ks[3], (1, linear_dim), jnp.float32)
    w_mrg = scale * jax.random.normal(ks[4], (linear_dim + enhance_dim, key_dim), jnp.float32)
    b_mrg = scale * jax.random.normal(ks[5], (1, key_dim), jnp.float32)
    return (w_enh, b_enh, w_lin, b_lin, w_mrg, b_mrg)


def reference(pre_context_out, rnn_input, params):
    w_enh, b_enh, w_lin, b_lin, w_mrg, b_mrg = params
    enhance = rnn_input @ w_enh + b_enh
    enhance = jnp.where(enhance > 0, enhance, NEG_SLOPE * enhance)
    h = pre_context_out @ w_lin + b_lin
    h = jnp.where(h > 0, h, NEG_SLOPE * h)
    h = jnp.concatenate([h, enhance], axis=2)
    h = h @ w_mrg + b_mrg
    B, T, K = h.shape
    return h.reshape(B, K, 1)


if __name__ == "__main__":
    # Small, module-consistent shapes.
    T = 1                      # required by the final view(B, key_dim, 1)
    input_dim = 16
    enhance_dim = 32
    decoder_dim = 24
    linear_dim = 32            # args.linear_dim
    key_dim = 48

    root = jax.random.PRNGKey(0)
    k_pre, k_rnn, k_par, k_pre2, k_rnn2 = jax.random.split(root, 5)

    params = init_params(k_par, input_dim, enhance_dim, decoder_dim, linear_dim, key_dim)
    fused_f32 = prepare_fused_params(params, dtype=jnp.float32)

    # --- small batch, forced through the Pallas path (f32, 1e-5 tolerance) ---
    B = 2
    pre_s = jax.random.normal(k_pre, (B, T, decoder_dim), jnp.float32)
    rnn_s = jax.random.normal(k_rnn, (B, T, input_dim), jnp.float32)
    out_s = jax.block_until_ready(
        query_with_enhance_input(pre_s, rnn_s, fused_f32, use_pallas=True))
    ref_s = reference(pre_s, rnn_s, params)
    assert out_s.shape == (B, key_dim, 1), out_s.shape
    assert jnp.allclose(out_s, ref_s, atol=1e-5, rtol=1e-5), "pallas f32 small-B mismatch"

    # --- larger, unaligned batch exercising the multi-step parallel grid ---
    B2 = 300
    pre_l = jax.random.normal(k_pre2, (B2, T, decoder_dim), jnp.float32)
    rnn_l = jax.random.normal(k_rnn2, (B2, T, input_dim), jnp.float32)
    out_l = jax.block_until_ready(
        query_with_enhance_input(pre_l, rnn_l, fused_f32))
    ref_l = reference(pre_l, rnn_l, params)
    assert jnp.allclose(out_l, ref_l, atol=1e-5, rtol=1e-5), "pallas f32 large-B mismatch"

    # --- bf16 activations/weights (v6e/v7x traffic saver), f32 accumulation ---
    fused_bf16 = prepare_fused_params(params, dtype=jnp.bfloat16)
    out_b = jax.block_until_ready(
        query_with_enhance_input(pre_l, rnn_l, fused_bf16))
    assert jnp.allclose(out_b, ref_l, atol=5e-2, rtol=5e-2), "pallas bf16 mismatch"

    # --- tiny batch auto-routes to the plain-XLA fallback ---
    out_x = jax.block_until_ready(
        query_with_enhance_input(pre_s, rnn_s, fused_f32))  # B=2 <= 64 -> XLA path
    assert jnp.allclose(out_x, ref_s, atol=1e-5, rtol=1e-5), "xla fallback mismatch"

    print("KERNEL_OK")
</pallas_src>

<mosaic_0001>
module attributes {stable_mosaic.version = 11 : i64} {
  func.func @_fused_mlp_kernel(%arg0: i32, %arg1: memref<8x24xf32, #tpu.memory_space<vmem>>, %arg2: memref<8x16xf32, #tpu.memory_space<vmem>>, %arg3: memref<24x128xf32, #tpu.memory_space<vmem>>, %arg4: memref<16x128xf32, #tpu.memory_space<vmem>>, %arg5: memref<1x128xf32, #tpu.memory_space<vmem>>, %arg6: memref<128x48xf32, #tpu.memory_space<vmem>>, %arg7: memref<1x48xf32, #tpu.memory_space<vmem>>, %arg8: memref<8x48xf32, #tpu.memory_space<vmem>>) attributes {dimension_semantics = [#tpu.dimension_semantics<parallel>], iteration_bounds = array<i64: 1>, scalar_prefetch = 0 : i64, scratch_operands = 0 : i64, tpu.core_type = #tpu.core_type<tc>, window_params = [{transform_indices = @transform_0, window_bounds = array<i64: 8, 24>}, {transform_indices = @transform_1, window_bounds = array<i64: 8, 16>}, {pipeline_mode = #tpu.pipeline_mode<synchronous>, transform_indices = @transform_2, window_bounds = array<i64: 24, 128>}, {pipeline_mode = #tpu.pipeline_mode<synchronous>, transform_indices = @transform_3, window_bounds = array<i64: 16, 128>}, {pipeline_mode = #tpu.pipeline_mode<synchronous>, transform_indices = @transform_4, window_bounds = array<i64: 1, 128>}, {pipeline_mode = #tpu.pipeline_mode<synchronous>, transform_indices = @transform_5, window_bounds = array<i64: 128, 48>}, {pipeline_mode = #tpu.pipeline_mode<synchronous>, transform_indices = @transform_6, window_bounds = array<i64: 1, 48>}, {transform_indices = @transform_7, window_bounds = array<i64: 8, 48>}]} {
    %c0 = arith.constant 0 : index
    %c0_0 = arith.constant 0 : index
    %0 = vector.load %arg1[%c0, %c0_0] : memref<8x24xf32, #tpu.memory_space<vmem>>, vector<8x24xf32>
    %c0_1 = arith.constant 0 : index
    %c0_2 = arith.constant 0 : index
    %1 = vector.load %arg3[%c0_1, %c0_2] : memref<24x128xf32, #tpu.memory_space<vmem>>, vector<24x128xf32>
    %cst = arith.constant dense<0.000000e+00> : vector<8x128xf32>
    %2 = tpu.matmul %0, %1, %cst {dimension_numbers = #tpu.dot_dimension_numbers<[1], [0], [0], [1], [0, 0, 1, 1], [], []>} : vector<8x24xf32>, vector<24x128xf32>, vector<8x128xf32> -> vector<8x128xf32>
    %c0_3 = arith.constant 0 : index
    %c0_4 = arith.constant 0 : index
    %3 = vector.load %arg2[%c0_3, %c0_4] : memref<8x16xf32, #tpu.memory_space<vmem>>, vector<8x16xf32>
    %c0_5 = arith.constant 0 : index
    %c0_6 = arith.constant 0 : index
    %4 = vector.load %arg4[%c0_5, %c0_6] : memref<16x128xf32, #tpu.memory_space<vmem>>, vector<16x128xf32>
    %cst_7 = arith.constant dense<0.000000e+00> : vector<8x128xf32>
    %5 = tpu.matmul %3, %4, %cst_7 {dimension_numbers = #tpu.dot_dimension_numbers<[1], [0], [0], [1], [0, 0, 1, 1], [], []>} : vector<8x16xf32>, vector<16x128xf32>, vector<8x128xf32> -> vector<8x128xf32>
    %6 = arith.addf %2, %5 : vector<8x128xf32>
    %c0_8 = arith.constant 0 : index
    %c0_9 = arith.constant 0 : index
    %7 = vector.load %arg5[%c0_8, %c0_9] : memref<1x128xf32, #tpu.memory_space<vmem>>, vector<1x128xf32>
    %8 = vector.broadcast %7 : vector<1x128xf32> to vector<8x128xf32>
    %9 = arith.addf %6, %8 : vector<8x128xf32>
    %cst_10 = arith.constant 0.000000e+00 : f32
    %10 = vector.broadcast %cst_10 : f32 to vector<8x128xf32>
    %11 = arith.cmpf ogt, %9, %10 : vector<8x128xf32>
    %cst_11 = arith.constant 0.00999999977 : f32
    %12 = vector.broadcast %cst_11 : f32 to vector<8x128xf32>
    %13 = arith.mulf %12, %9 : vector<8x128xf32>
    %14 = arith.select %11, %9, %13 : vector<8x128xi1>, vector<8x128xf32>
    %c0_12 = arith.constant 0 : index
    %c0_13 = arith.constant 0 : index
    %15 = vector.load %arg6[%c0_12, %c0_13] : memref<128x48xf32, #tpu.memory_space<vmem>>, vector<128x48xf32>
    %cst_14 = arith.constant dense<0.000000e+00> : vector<8x48xf32>
    %16 = tpu.matmul %14, %15, %cst_14 {dimension_numbers = #tpu.dot_dimension_numbers<[1], [0], [0], [1], [0, 0, 1, 1], [], []>} : vector<8x128xf32>, vector<128x48xf32>, vector<8x48xf32> -> vector<8x48xf32>
    %c0_15 = arith.constant 0 : index
    %c0_16 = arith.constant 0 : index
    %17 = vector.load %arg7[%c0_15, %c0_16] : memref<1x48xf32, #tpu.memory_space<vmem>>, vector<1x48xf32>
    %18 = vector.broadcast %17 : vector<1x48xf32> to vector<8x48xf32>
    %19 = arith.addf %16, %18 : vector<8x48xf32>
    %c0_17 = arith.constant 0 : index
    %c0_18 = arith.constant 0 : index
    %20 = vector.load %arg8[%c0_17, %c0_18] : memref<8x48xf32, #tpu.memory_space<vmem>>, vector<8x48xf32>
    tpu.vector_store %arg8[%c0_17, %c0_18], %19 {strides = array<i32>} : memref<8x48xf32, #tpu.memory_space<vmem>>, vector<8x48xf32>,
    return
  }
  func.func @transform_0(%arg0: i32) -> (i32, i32) {
    %c0_i32 = arith.constant 0 : i32
    %c0_i32_0 = arith.constant 0 : i32
    return %arg0, %c0_i32 : i32, i32
  }
  func.func @transform_1(%arg0: i32) -> (i32, i32) {
    %c0_i32 = arith.constant 0 : i32
    %c0_i32_0 = arith.constant 0 : i32
    return %arg0, %c0_i32 : i32, i32
  }
  func.func @transform_2(%arg0: i32) -> (i32, i32) {
    %c0_i32 = arith.constant 0 : i32
    %c0_i32_0 = arith.constant 0 : i32
    %c0_i32_1 = arith.constant 0 : i32
    return %c0_i32, %c0_i32_0 : i32, i32
  }
  func.func @transform_3(%arg0: i32) -> (i32, i32) {
    %c0_i32 = arith.constant 0 : i32
    %c0_i32_0 = arith.constant 0 : i32
    %c0_i32_1 = arith.constant 0 : i32
    return %c0_i32, %c0_i32_0 : i32, i32
  }
  func.func @transform_4(%arg0: i32) -> (i32, i32) {
    %c0_i32 = arith.constant 0 : i32
    %c0_i32_0 = arith.constant 0 : i32
    %c0_i32_1 = arith.constant 0 : i32
    return %c0_i32, %c0_i32_0 : i32, i32
  }
  func.func @transform_5(%arg0: i32) -> (i32, i32) {
    %c0_i32 = arith.constant 0 : i32
    %c0_i32_0 = arith.constant 0 : i32
    %c0_i32_1 = arith.constant 0 : i32
    return %c0_i32, %c0_i32_0 : i32, i32
  }
  func.func @transform_6(%arg0: i32) -> (i32, i32) {
    %c0_i32 = arith.constant 0 : i32
    %c0_i32_0 = arith.constant 0 : i32
    %c0_i32_1 = arith.constant 0 : i32
    return %c0_i32, %c0_i32_0 : i32, i32
  }
  func.func @transform_7(%arg0: i32) -> (i32, i32) {
    %c0_i32 = arith.constant 0 : i32
    %c0_i32_0 = arith.constant 0 : i32
    return %arg0, %c0_i32 : i32, i32
  }
}

</mosaic_0001>

<llo_original>
// kernel: tpu_custom_call.1
$region0: #{tpu_custom_call.1}
  #allocation0 [shape = 'u32[]', space=smem, size = 0x4, offset = 0x4, fixed_abs, tag = 'smem constant byte address 0x4 - core index']
  #allocation1 [shape = 'u32[144,128]{1,0:T(1,128)}', space=vmem, size = 0x12000, scoped, tag = 'internal scratch']
  %s0 = inlined_call_operand.vmem [shape: f32[8,24], index: 0, kind: input, shape index: {}]
  %s1 = inlined_call_operand.vmem [shape: f32[8,16], index: 1, kind: input, shape index: {}]
  %s2 = inlined_call_operand.vmem [shape: f32[24,128], index: 2, kind: input, shape index: {}]
  %s3 = inlined_call_operand.vmem [shape: f32[16,128], index: 3, kind: input, shape index: {}]
  %s4 = inlined_call_operand.vmem [shape: f32[1,128], index: 4, kind: input, shape index: {}]
  %s5 = inlined_call_operand.vmem [shape: f32[128,48], index: 5, kind: input, shape index: {}]
  %s6 = inlined_call_operand.vmem [shape: f32[1,48], index: 6, kind: input, shape index: {}]
  %s7 = inlined_call_operand.hbm [shape: f32[8,48], index: 7, kind: output, shape index: {}]
  %s8 = sld [smem:[#allocation0]]
  $region38: #{tpu_custom_call.1} parent=0
    _
  %s10 = ssub.s32 1, %s8
  %s11 = scalar_select 0, %s10, %s8
  $region1: #{tpu_custom_call.1} parent=0
    #allocation2 [shape = 'u8[4096]{0}', space=vmem, size = 0x1000, scoped, tag = 'output window, operand 0, single buffered']
    #allocation3 [shape = 's32[1]{0}', space=sflag, size = 0x4, scoped, tag = 'scoped memory for tpu_custom_call.1']
    %12 = vsyncpa [#allocation3], 0
    // Predicated region
    $region2: #{tpu_custom_call.1} parent=1 // pred_check
      _
    $region3: #{tpu_custom_call.1} parent=1 // pred_check_branch
      %14 = sbr.rel (0) target = $region5
    $region4: #{tpu_custom_call.1} parent=1 // pred_region
      _
    $region5: #{tpu_custom_call.1} parent=1 // pred_fallthru
      _
    // Predicated region
    $region6: #{tpu_custom_call.1} parent=1 // pred_check
      _
    $region7: #{tpu_custom_call.1} parent=1 // pred_check_branch
      %16 = sbr.rel (0) target = $region9
    $region8: #{tpu_custom_call.1} parent=1 // pred_region
      _
    $region9: #{tpu_custom_call.1} parent=1 // pred_fallthru
      _
    // Predicated region
    $region10: #{tpu_custom_call.1} parent=1 // pred_check
      _
    $region11: #{tpu_custom_call.1} parent=1 // pred_check_branch
      %18 = sbr.rel (0) target = $region13
    $region12: #{tpu_custom_call.1} parent=1 // pred_region
      _
    $region13: #{tpu_custom_call.1} parent=1 // pred_fallthru
      _
    // Predicated region
    $region14: #{tpu_custom_call.1} parent=1 // pred_check
      _
    $region15: #{tpu_custom_call.1} parent=1 // pred_check_branch
      %20 = sbr.rel (0) target = $region17
    $region16: #{tpu_custom_call.1} parent=1 // pred_region
      _
    $region17: #{tpu_custom_call.1} parent=1 // pred_fallthru
      _
    // Predicated region
    $region18: #{tpu_custom_call.1} parent=1 // pred_check
      _
    $region19: #{tpu_custom_call.1} parent=1 // pred_check_branch
      %22 = sbr.rel (0) target = $region21
    $region20: #{tpu_custom_call.1} parent=1 // pred_region
      _
    $region21: #{tpu_custom_call.1} parent=1 // pred_fallthru
      _
    // Predicated region
    $region22: #{tpu_custom_call.1} parent=1 // pred_check
      _
    $region23: #{tpu_custom_call.1} parent=1 // pred_check_branch
      %24 = sbr.rel (0) target = $region25
    $region24: #{tpu_custom_call.1} parent=1 // pred_region
      _
    $region25: #{tpu_custom_call.1} parent=1 // pred_fallthru
      _
    // Predicated region
    $region26: #{tpu_custom_call.1} parent=1 // pred_check
      _
    $region27: #{tpu_custom_call.1} parent=1 // pred_check_branch
      %26 = sbr.rel (0) target = $region29
    $region28: #{tpu_custom_call.1} parent=1 // pred_region
      _
    $region29: #{tpu_custom_call.1} parent=1 // pred_fallthru
      _
    %v27 = vld [vmem:[%s0] sm:$0xff]
    %v28 = vld [vmem:[%s2] sm:$0xff]
    %v29 = vld [vmem:[%s2 + $0x8] sm:$0xff]
    %v30 = vld [vmem:[%s2 + $0x10] sm:$0xff]
    %v31 = vld [vmem:[%s1] sm:$0xff]
    %v32 = vld [vmem:[%s3] sm:$0xff]
    %v33 = vld [vmem:[%s3 + $0x8] sm:$0xff]
    %vm34 = vcmask 130048
    %v36 = vsel %vm34, %v31, 0
    %38 = vmatprep.subr.mxu0 0.0
    %39 = vmatpush1.msra.mxu0 0.0
    %40 = vmatprep.subr.mxu0 0.0
    %41 = vmatpush1.msra.mxu0 0.0
    %42 = vmatprep.subr.mxu0 0.0
    %43 = vmatpush1.msra.mxu0 0.0
    %44 = vmatprep.subr.mxu0 0.0
    %45 = vmatpush1.msra.mxu0 0.0
    %46 = vmatprep.subr.mxu0 0.0
    %47 = vmatpush1.msra.mxu0 0.0
    %48 = vmatprep.subr.mxu0 0.0
    %49 = vmatpush1.msra.mxu0 0.0
    %50 = vmatprep.subr.mxu0 0.0
    %51 = vmatpush1.msra.mxu0 0.0
    %52 = vmatprep.subr.mxu0 0.0
    %53 = vmatpush1.msra.mxu0 0.0
    %54 = vmatprep.subr.mxu0 0.0
    %55 = vmatpush1.msra.mxu0 0.0
    %56 = vmatprep.subr.mxu0 0.0
    %57 = vmatpush1.msra.mxu0 0.0
    %58 = vmatprep.subr.mxu0 0.0
    %59 = vmatpush1.msra.mxu0 0.0
    %60 = vmatprep.subr.mxu0 0.0
    %61 = vmatpush1.msra.mxu0 0.0
    %62 = vmatprep.subr.mxu0 0.0
    %63 = vmatpush1.msra.mxu0 0.0
    %64 = vmatprep.subr.mxu0 0.0
    %65 = vmatpush1.msra.mxu0 0.0
    %66 = vmatprep.subr.mxu0 0.0
    %67 = vmatpush1.msra.mxu0 %v33
    %68 = vmatprep.subr.mxu0 0.0
    %69 = vmatpush1.msra.mxu0 %v32
    %70 = vmatprep.subr.mxu0 0.0
    %71 = vmatpush2.msra.mxu0 0.0
    %72 = vmatprep.subr.mxu0 0.0
    %73 = vmatpush2.msra.mxu0 0.0
    %74 = vmatprep.subr.mxu0 0.0
    %75 = vmatpush2.msra.mxu0 0.0
    %76 = vmatprep.subr.mxu0 0.0
    %77 = vmatpush2.msra.mxu0 0.0
    %78 = vmatprep.subr.mxu0 0.0
    %79 = vmatpush2.msra.mxu0 0.0
    %80 = vmatprep.subr.mxu0 0.0
    %81 = vmatpush2.msra.mxu0 0.0
    %82 = vmatprep.subr.mxu0 0.0
    %83 = vmatpush2.msra.mxu0 0.0
    %84 = vmatprep.subr.mxu0 0.0
    %85 = vmatpush2.msra.mxu0 0.0
    %86 = vmatprep.subr.mxu0 0.0
    %87 = vmatpush2.msra.mxu0 0.0
    %88 = vmatprep.subr.mxu0 0.0
    %89 = vmatpush2.msra.mxu0 0.0
    %90 = vmatprep.subr.mxu0 0.0
    %91 = vmatpush2.msra.mxu0 0.0
    %92 = vmatprep.subr.mxu0 0.0
    %93 = vmatpush2.msra.mxu0 0.0
    %94 = vmatprep.subr.mxu0 0.0
    %95 = vmatpush2.msra.mxu0 0.0
    %96 = vmatprep.subr.mxu0 0.0
    %97 = vmatpush2.msra.mxu0 0.0
    %98 = vmatprep.subr.mxu0 0.0
    %99 = vmatpush2.msra.mxu0 0.0
    %100 = vmatprep.subr.mxu0 0.0
    %101 = vmatpush2.msra.mxu0 0.0
    %102 = vmatprep.mubr.f32.mxu0 0.0
    %103 = vmatmul.mubr.f32.gmra.mxu0 %v36
    %v104 = vpop.f32.mrf.mxu0
    %v105 = vadd.f32 0.0, %v104
    %v106 = vpop.f32.mrf.mxu0
    %107 = vdwg.mxu0
    %vm108 = vcmask 195584
    %v110 = vsel %vm108, %v27, 0
    %112 = vmatprep.subr.mxu0 0.0
    %113 = vmatpush1.msra.mxu0 0.0
    %114 = vmatprep.subr.mxu0 0.0
    %115 = vmatpush1.msra.mxu0 0.0
    %116 = vmatprep.subr.mxu0 0.0
    %117 = vmatpush1.msra.mxu0 0.0
    %118 = vmatprep.subr.mxu0 0.0
    %119 = vmatpush1.msra.mxu0 0.0
    %120 = vmatprep.subr.mxu0 0.0
    %121 = vmatpush1.msra.mxu0 0.0
    %122 = vmatprep.subr.mxu0 0.0
    %123 = vmatpush1.msra.mxu0 0.0
    %124 = vmatprep.subr.mxu0 0.0
    %125 = vmatpush1.msra.mxu0 0.0
    %126 = vmatprep.subr.mxu0 0.0
    %127 = vmatpush1.msra.mxu0 0.0
    %128 = vmatprep.subr.mxu0 0.0
    %129 = vmatpush1.msra.mxu0 0.0
    %130 = vmatprep.subr.mxu0 0.0
    %131 = vmatpush1.msra.mxu0 0.0
    %132 = vmatprep.subr.mxu0 0.0
    %133 = vmatpush1.msra.mxu0 0.0
    %134 = vmatprep.subr.mxu0 0.0
    %135 = vmatpush1.msra.mxu0 0.0
    %136 = vmatprep.subr.mxu0 0.0
    %137 = vmatpush1.msra.mxu0 0.0
    %138 = vmatprep.subr.mxu0 0.0
    %139 = vmatpush1.msra.mxu0 %v30
    %140 = vmatprep.subr.mxu0 0.0
    %141 = vmatpush1.msra.mxu0 %v29
    %142 = vmatprep.subr.mxu0 0.0
    %143 = vmatpush1.msra.mxu0 %v28
    %144 = vmatprep.subr.mxu0 0.0
    %145 = vmatpush2.msra.mxu0 0.0
    %146 = vmatprep.subr.mxu0 0.0
    %147 = vmatpush2.msra.mxu0 0.0
    %148 = vmatprep.subr.mxu0 0.0
    %149 = vmatpush2.msra.mxu0 0.0
    %150 = vmatprep.subr.mxu0 0.0
    %151 = vmatpush2.msra.mxu0 0.0
    %152 = vmatprep.subr.mxu0 0.0
    %153 = vmatpush2.msra.mxu0 0.0
    %154 = vmatprep.subr.mxu0 0.0
    %155 = vmatpush2.msra.mxu0 0.0
    %156 = vmatprep.subr.mxu0 0.0
    %157 = vmatpush2.msra.mxu0 0.0
    %158 = vmatprep.subr.mxu0 0.0
    %159 = vmatpush2.msra.mxu0 0.0
    %160 = vmatprep.subr.mxu0 0.0
    %161 = vmatpush2.msra.mxu0 0.0
    %162 = vmatprep.subr.mxu0 0.0
    %163 = vmatpush2.msra.mxu0 0.0
    %164 = vmatprep.subr.mxu0 0.0
    %165 = vmatpush2.msra.mxu0 0.0
    %166 = vmatprep.subr.mxu0 0.0
    %167 = vmatpush2.msra.mxu0 0.0
    %168 = vmatprep.subr.mxu0 0.0
    %169 = vmatpush2.msra.mxu0 0.0
    %170 = vmatprep.subr.mxu0 0.0
    %171 = vmatpush2.msra.mxu0 0.0
    %172 = vmatprep.subr.mxu0 0.0
    %173 = vmatpush2.msra.mxu0 0.0
    %174 = vmatprep.subr.mxu0 0.0
    %175 = vmatpush2.msra.mxu0 0.0
    %176 = vmatprep.mubr.f32.mxu0 0.0
    %177 = vmatmul.mubr.f32.gmra.mxu0 %v110
    %v178 = vpop.f32.mrf.mxu0
    %v179 = vadd.f32 %v105, %v178
    %v180 = vpop.f32.mrf.mxu0
    %181 = vdwg.mxu0
    %v182 = vld [vmem:[%s4] sm:$0x1]
    %v184 = vlaneseq
    %v185 = vshrl.u32 %v184, 7
    %v186 = vsub.s32 0, %v185
    %v187 = vrot.slane %v182, %v186
    %v189 = vadd.f32 %v179, %v187
    %vm190 = vcmp.gt.f32.partialorder %v189, 0.0
    %v191 = vmul.f32 %v189, 0.01
    %v192 = vsel %vm190, %v189, %v191
    %v193 = vld [vmem:[%s5] sm:$0xff]
    %v194 = vld [vmem:[%s5 + $0x8] sm:$0xff]
    %v195 = vld [vmem:[%s5 + $0x10] sm:$0xff]
    %v196 = vld [vmem:[%s5 + $0x18] sm:$0xff]
    %v197 = vld [vmem:[%s5 + $0x20] sm:$0xff]
    %v198 = vld [vmem:[%s5 + $0x28] sm:$0xff]
    %v199 = vld [vmem:[%s5 + $0x30] sm:$0xff]
    %v200 = vld [vmem:[%s5 + $0x38] sm:$0xff]
    %v201 = vld [vmem:[%s5 + $0x40] sm:$0xff]
    %v202 = vld [vmem:[%s5 + $0x48] sm:$0xff]
    %v203 = vld [vmem:[%s5 + $0x50] sm:$0xff]
    %v204 = vld [vmem:[%s5 + $0x58] sm:$0xff]
    %v205 = vld [vmem:[%s5 + $0x60] sm:$0xff]
    %v206 = vld [vmem:[%s5 + $0x68] sm:$0xff]
    %v207 = vld [vmem:[%s5 + $0x70] sm:$0xff]
    %v208 = vld [vmem:[%s5 + $0x78] sm:$0xff]
    %v209 = vld [vmem:[%s6] sm:$0x1]
    %v211 = vlaneseq
    %v212 = vshrl.u32 %v211, 7
    %v213 = vsub.s32 0, %v212
    %v214 = vrot.slane %v209, %v213
    %216 = vmatprep.subr.mxu0 0.0
    %217 = vmatpush1.msra.mxu0 %v208
    %218 = vmatprep.subr.mxu0 0.0
    %219 = vmatpush1.msra.mxu0 %v207
    %220 = vmatprep.subr.mxu0 0.0
    %221 = vmatpush1.msra.mxu0 %v206
    %222 = vmatprep.subr.mxu0 0.0
    %223 = vmatpush1.msra.mxu0 %v205
    %224 = vmatprep.subr.mxu0 0.0
    %225 = vmatpush1.msra.mxu0 %v204
    %226 = vmatprep.subr.mxu0 0.0
    %227 = vmatpush1.msra.mxu0 %v203
    %228 = vmatprep.subr.mxu0 0.0
    %229 = vmatpush1.msra.mxu0 %v202
    %230 = vmatprep.subr.mxu0 0.0
    %231 = vmatpush1.msra.mxu0 %v201
    %232 = vmatprep.subr.mxu0 0.0
    %233 = vmatpush1.msra.mxu0 %v200
    %234 = vmatprep.subr.mxu0 0.0
    %235 = vmatpush1.msra.mxu0 %v199
    %236 = vmatprep.subr.mxu0 0.0
    %237 = vmatpush1.msra.mxu0 %v198
    %238 = vmatprep.subr.mxu0 0.0
    %239 = vmatpush1.msra.mxu0 %v197
    %240 = vmatprep.subr.mxu0 0.0
    %241 = vmatpush1.msra.mxu0 %v196
    %242 = vmatprep.subr.mxu0 0.0
    %243 = vmatpush1.msra.mxu0 %v195
    %244 = vmatprep.subr.mxu0 0.0
    %245 = vmatpush1.msra.mxu0 %v194
    %246 = vmatprep.subr.mxu0 0.0
    %247 = vmatpush1.msra.mxu0 %v193
    %248 = vmatprep.subr.mxu0 0.0
    %249 = vmatpush2.msra.mxu0 0.0
    %250 = vmatprep.subr.mxu0 0.0
    %251 = vmatpush2.msra.mxu0 0.0
    %252 = vmatprep.subr.mxu0 0.0
    %253 = vmatpush2.msra.mxu0 0.0
    %254 = vmatprep.subr.mxu0 0.0
    %255 = vmatpush2.msra.mxu0 0.0
    %256 = vmatprep.subr.mxu0 0.0
    %257 = vmatpush2.msra.mxu0 0.0
    %258 = vmatprep.subr.mxu0 0.0
    %259 = vmatpush2.msra.mxu0 0.0
    %260 = vmatprep.subr.mxu0 0.0
    %261 = vmatpush2.msra.mxu0 0.0
    %262 = vmatprep.subr.mxu0 0.0
    %263 = vmatpush2.msra.mxu0 0.0
    %264 = vmatprep.subr.mxu0 0.0
    %265 = vmatpush2.msra.mxu0 0.0
    %266 = vmatprep.subr.mxu0 0.0
    %267 = vmatpush2.msra.mxu0 0.0
    %268 = vmatprep.subr.mxu0 0.0
    %269 = vmatpush2.msra.mxu0 0.0
    %270 = vmatprep.subr.mxu0 0.0
    %271 = vmatpush2.msra.mxu0 0.0
    %272 = vmatprep.subr.mxu0 0.0
    %273 = vmatpush2.msra.mxu0 0.0
    %274 = vmatprep.subr.mxu0 0.0
    %275 = vmatpush2.msra.mxu0 0.0
    %276 = vmatprep.subr.mxu0 0.0
    %277 = vmatpush2.msra.mxu0 0.0
    %278 = vmatprep.subr.mxu0 0.0
    %279 = vmatpush2.msra.mxu0 0.0
    %280 = vmatprep.mubr.f32.mxu0 0.0
    %281 = vmatmul.mubr.f32.gmra.mxu0 %v192
    %v282 = vpop.f32.mrf.mxu0
    %v283 = vadd.f32 %v214, %v282
    %v284 = vpop.f32.mrf.mxu0
    %285 = vdwg.mxu0
    %vm286 = vcmask 392192
    %287 = vst.msk [vmem:[#allocation2] sm:$0xff] %vm286, %v283
    // Predicated region
    $region30: #{tpu_custom_call.1} parent=1 // pred_check
      _
    $region31: #{tpu_custom_call.1} parent=1 // pred_check_branch
      %289 = sbr.rel (0) target = $region33
    $region32: #{tpu_custom_call.1} parent=1 // pred_region
      %s291 = ssub.s32 128, 128
      %292 = vsyncadd [#allocation3], %s291
      %s294 = sshll.u32 [#allocation2], 4
      %s295 = int_to_ptr.vmem [resolvable:$true] %s294
      %297 = dma.vmem_to_hbm [thread:$0]  %s295, 128, %s7, [#allocation3]
    $region33: #{tpu_custom_call.1} parent=1 // pred_fallthru
      _
    // Predicated region
    $region34: #{tpu_custom_call.1} parent=1 // pred_check
      _
    $region35: #{tpu_custom_call.1} parent=1 // pred_check_branch
      %299 = sbr.rel (0) target = $region37
    $region36: #{tpu_custom_call.1} parent=1 // pred_region
      %300 = dma.done [#allocation3], 128
    $region37: #{tpu_custom_call.1} parent=1 // pred_fallthru
      _
    %301 = vsyncpa [#allocation3], 1

</llo_original>
